<compile_context>
chip_gen: v5e
topology: v5e:2x2
jax: 0.10.0
libtpu: 0.0.40
codegen_flags: <defaults>
</compile_context>

<pallas_src>
import jax
import jax.numpy as jnp
from jax.experimental import pallas as pl
from jax.experimental.pallas import tpu as pltpu


def _round_up(x, m):
    return ((x + m - 1) // m) * m


def _edge_predictor_kernel(u_ref, w_ref, wuw_ref, b_ref, o_ref):
    # u_ref/w_ref: [tile_n, D];  wuw_ref: [2, D] f32 (VMEM-resident);
    # b_ref: [1] f32 scalar in SMEM;  o_ref: [1, tile_n] f32 (lane-dense).
    dims = (((1,), (1,)), ((), ()))                 # contract the D axis of both
    wu = wuw_ref[0:1, :].astype(u_ref.dtype)        # tiny [1, D] casts (no-op for f32)
    ww = wuw_ref[1:2, :].astype(w_ref.dtype)
    s = jax.lax.dot_general(wu, u_ref[...], dims,
                            preferred_element_type=jnp.float32)   # [1, tile_n]
    s = s + jax.lax.dot_general(ww, w_ref[...], dims,
                                preferred_element_type=jnp.float32)
    o_ref[...] = jax.nn.sigmoid(s + b_ref[0]).astype(o_ref.dtype)


def edge_predictor(user_emb, wine_emb, weight, bias, *, tile_n=8192):
    """sigmoid(cat([user_emb, wine_emb], 1) @ weight.T + bias).

    user_emb, wine_emb: [N, D];  weight: [1, 2*D];  bias: [1].  Returns [N, 1] f32.
    """
    N, D = user_emb.shape
    assert wine_emb.shape == (N, D)
    assert weight.shape == (1, 2 * D)

    # Split the Linear weight (avoids the concat); single resident [2, D] operand.
    wuw = weight.reshape(2, D).astype(jnp.float32)      # row 0 = Wu, row 1 = Ww
    b = bias.reshape((1,)).astype(jnp.float32)          # SMEM scalar

    # Tile selection: one block when N fits; otherwise lane-dense multiples of
    # 128, shrunk so large N still yields >= 4 grid steps (v7x dual-TC + pipeline).
    if N <= tile_n:
        tile_n = _round_up(max(N, 1), 8)
    else:
        tile_n = max(128, _round_up(tile_n, 128))
        while tile_n > 1024 and pl.cdiv(N, tile_n) < 4:
            tile_n //= 2
    num_tiles = pl.cdiv(N, tile_n)

    out = pl.pallas_call(
        _edge_predictor_kernel,
        out_shape=jax.ShapeDtypeStruct((1, num_tiles * tile_n), jnp.float32),
        grid=(num_tiles,),
        in_specs=[
            pl.BlockSpec((tile_n, D), lambda i: (i, 0)),
            pl.BlockSpec((tile_n, D), lambda i: (i, 0)),
            pl.BlockSpec((2, D), lambda i: (0, 0)),              # VMEM-resident weights
            pl.BlockSpec(memory_space=pltpu.MemorySpace.SMEM),   # bias scalar
        ],
        out_specs=pl.BlockSpec((1, tile_n), lambda i: (0, i)),
        compiler_params=pltpu.CompilerParams(
            dimension_semantics=("parallel",)),
    )(user_emb, wine_emb, wuw, b)

    # Lane-dense [1, num_tiles*tile_n] -> [N, 1]; tail garbage (ragged block) dropped.
    return out.reshape(-1)[:N].reshape(N, 1)


def _reference(user_emb, wine_emb, weight, bias):
    interaction = jnp.concatenate([user_emb, wine_emb], axis=1)
    return jax.nn.sigmoid(interaction @ weight.T + bias)


if __name__ == "__main__":
    feature_dim = 32

    key = jax.random.PRNGKey(0)
    k_u, k_w, k_wt, k_b, k_u2, k_w2 = jax.random.split(key, 6)

    # nn.Linear(2*D, 1) weights, PyTorch-default uniform init.
    in_features = feature_dim * 2
    bound = 1.0 / jnp.sqrt(jnp.float32(in_features))
    weight = jax.random.uniform(
        k_wt, (1, in_features), minval=-bound, maxval=bound, dtype=jnp.float32)
    bias = jax.random.uniform(
        k_b, (1,), minval=-bound, maxval=bound, dtype=jnp.float32)

    # --- Small case (single tile): N = 8 pairs -------------------------------
    N = 8
    user_emb = jax.random.normal(k_u, (N, feature_dim), dtype=jnp.float32)
    wine_emb = jax.random.normal(k_w, (N, feature_dim), dtype=jnp.float32)

    score = edge_predictor(user_emb, wine_emb, weight, bias)
    jax.block_until_ready(score)
    assert score.shape == (N, 1)

    ref = _reference(user_emb, wine_emb, weight, bias)
    assert jnp.allclose(score, ref, atol=2e-3, rtol=2e-3)

    # --- Larger case, single big tile: N = 2000 ------------------------------
    N2 = 2000
    user_emb2 = jax.random.normal(k_u2, (N2, feature_dim), dtype=jnp.float32)
    wine_emb2 = jax.random.normal(k_w2, (N2, feature_dim), dtype=jnp.float32)

    score2 = edge_predictor(user_emb2, wine_emb2, weight, bias)
    jax.block_until_ready(score2)
    assert score2.shape == (N2, 1)
    ref2 = _reference(user_emb2, wine_emb2, weight, bias)
    assert jnp.allclose(score2, ref2, atol=2e-3, rtol=2e-3)

    # --- Multi-tile + ragged last block path: N = 2000, tile_n = 512 ---------
    score3 = edge_predictor(user_emb2, wine_emb2, weight, bias, tile_n=512)
    jax.block_until_ready(score3)
    assert score3.shape == (N2, 1)
    assert jnp.allclose(score3, ref2, atol=2e-3, rtol=2e-3)

    print("KERNEL_OK")
</pallas_src>

<mosaic_0001>
module attributes {stable_mosaic.version = 11 : i64} {
  func.func @_edge_predictor_kernel(%arg0: i32, %arg1: memref<8x32xf32, #tpu.memory_space<vmem>>, %arg2: memref<8x32xf32, #tpu.memory_space<vmem>>, %arg3: memref<2x32xf32, #tpu.memory_space<vmem>>, %arg4: memref<1xf32, #tpu.memory_space<smem>>, %arg5: memref<1x8xf32, #tpu.memory_space<vmem>>) attributes {dimension_semantics = [#tpu.dimension_semantics<parallel>], iteration_bounds = array<i64: 1>, scalar_prefetch = 0 : i64, scratch_operands = 0 : i64, tpu.core_type = #tpu.core_type<tc>, window_params = [{transform_indices = @transform_0, window_bounds = array<i64: 8, 32>}, {transform_indices = @transform_1, window_bounds = array<i64: 8, 32>}, {pipeline_mode = #tpu.pipeline_mode<synchronous>, transform_indices = @transform_2, window_bounds = array<i64: 2, 32>}, {transform_indices = @transform_3, window_bounds = array<i64: 1>}, {transform_indices = @transform_4, window_bounds = array<i64: 1, 8>}]} {
    %c0 = arith.constant 0 : index
    %c0_0 = arith.constant 0 : index
    %0 = vector.load %arg3[%c0, %c0_0] : memref<2x32xf32, #tpu.memory_space<vmem>>, vector<1x32xf32>
    %c1 = arith.constant 1 : index
    %c0_1 = arith.constant 0 : index
    %1 = vector.load %arg3[%c1, %c0_1] : memref<2x32xf32, #tpu.memory_space<vmem>>, vector<1x32xf32>
    %c0_2 = arith.constant 0 : index
    %c0_3 = arith.constant 0 : index
    %2 = vector.load %arg1[%c0_2, %c0_3] : memref<8x32xf32, #tpu.memory_space<vmem>>, vector<8x32xf32>
    %cst = arith.constant dense<0.000000e+00> : vector<1x8xf32>
    %3 = tpu.matmul %0, %2, %cst {dimension_numbers = #tpu.dot_dimension_numbers<[1], [1], [0], [0], [0, 0, 1, 0], [], []>} : vector<1x32xf32>, vector<8x32xf32>, vector<1x8xf32> -> vector<1x8xf32>
    %c0_4 = arith.constant 0 : index
    %c0_5 = arith.constant 0 : index
    %4 = vector.load %arg2[%c0_4, %c0_5] : memref<8x32xf32, #tpu.memory_space<vmem>>, vector<8x32xf32>
    %cst_6 = arith.constant dense<0.000000e+00> : vector<1x8xf32>
    %5 = tpu.matmul %1, %4, %cst_6 {dimension_numbers = #tpu.dot_dimension_numbers<[1], [1], [0], [0], [0, 0, 1, 0], [], []>} : vector<1x32xf32>, vector<8x32xf32>, vector<1x8xf32> -> vector<1x8xf32>
    %6 = arith.addf %3, %5 : vector<1x8xf32>
    %c0_7 = arith.constant 0 : index
    %7 = memref.load %arg4[%c0_7] : memref<1xf32, #tpu.memory_space<smem>>
    %8 = vector.broadcast %7 : f32 to vector<1x8xf32>
    %9 = arith.addf %6, %8 : vector<1x8xf32>
    %10 = arith.negf %9 : vector<1x8xf32>
    %11 = math.exp %10 : vector<1x8xf32>
    %cst_8 = arith.constant 1.000000e+00 : f32
    %12 = vector.broadcast %cst_8 : f32 to vector<1x8xf32>
    %13 = arith.addf %12, %11 : vector<1x8xf32>
    %14 = arith.divf %12, %13 : vector<1x8xf32>
    %c0_9 = arith.constant 0 : index
    %c0_10 = arith.constant 0 : index
    %15 = vector.load %arg5[%c0_9, %c0_10] : memref<1x8xf32, #tpu.memory_space<vmem>>, vector<1x8xf32>
    tpu.vector_store %arg5[%c0_9, %c0_10], %14 {strides = array<i32>} : memref<1x8xf32, #tpu.memory_space<vmem>>, vector<1x8xf32>,
    return
  }
  func.func @transform_0(%arg0: i32) -> (i32, i32) {
    %c0_i32 = arith.constant 0 : i32
    %c0_i32_0 = arith.constant 0 : i32
    return %arg0, %c0_i32 : i32, i32
  }
  func.func @transform_1(%arg0: i32) -> (i32, i32) {
    %c0_i32 = arith.constant 0 : i32
    %c0_i32_0 = arith.constant 0 : i32
    return %arg0, %c0_i32 : i32, i32
  }
  func.func @transform_2(%arg0: i32) -> (i32, i32) {
    %c0_i32 = arith.constant 0 : i32
    %c0_i32_0 = arith.constant 0 : i32
    %c0_i32_1 = arith.constant 0 : i32
    return %c0_i32, %c0_i32_0 : i32, i32
  }
  func.func @transform_3(%arg0: i32) -> i32 {
    %c0_i32 = arith.constant 0 : i32
    %c0_i32_0 = arith.constant 0 : i32
    return %c0_i32 : i32
  }
  func.func @transform_4(%arg0: i32) -> (i32, i32) {
    %c0_i32 = arith.constant 0 : i32
    %c0_i32_0 = arith.constant 0 : i32
    return %c0_i32, %arg0 : i32, i32
  }
}

</mosaic_0001>

<llo_original>
// kernel: tpu_custom_call.1
$region0: #{tpu_custom_call.1}
  #allocation0 [shape = 'u32[]', space=smem, size = 0x4, offset = 0x4, fixed_abs, tag = 'smem constant byte address 0x4 - core index']
  #allocation1 [shape = 'u32[72,128]{1,0:T(1,128)}', space=vmem, size = 0x9000, scoped, tag = 'internal scratch']
  #allocation2 [shape = 'f32[1]{0:T(128)S(6)}', space=smem, size = 0x200, scoped, tag = 'scoped memory for tpu_custom_call.1']
  %s0 = inlined_call_operand.hbm [shape: f32[8,32], index: 0, kind: input, shape index: {}]
  %s1 = inlined_call_operand.hbm [shape: f32[8,32], index: 1, kind: input, shape index: {}]
  %s2 = inlined_call_operand.vmem [shape: f32[2,32], index: 2, kind: input, shape index: {}]
  %s3 = inlined_call_operand.<no memory space> [shape: f32[1], index: 3, kind: input, shape index: {}]
  %s4 = inlined_call_operand.hbm [shape: f32[1,8], index: 4, kind: output, shape index: {}]
  %s5 = sld [smem:[#allocation0]]
  $region34: #{tpu_custom_call.1} parent=0
    _
  %s7 = ssub.s32 1, %s5
  %s8 = scalar_select 0, %s7, %s5
  %9 = sst [smem:[#allocation2]] %s3
  $region1: #{tpu_custom_call.1} parent=0
    #allocation3 [shape = 'u8[4096]{0}', space=vmem, size = 0x1000, scoped, tag = 'input window, operand 0, single buffered']
    #allocation4 [shape = 's32[1]{0}', space=sflag, size = 0x4, scoped, tag = 'scoped memory for tpu_custom_call.1']
    #allocation5 [shape = 's32[1]{0}', space=sflag, size = 0x4, scoped, tag = 'scoped memory for tpu_custom_call.1']
    #allocation6 [shape = 'u8[4096]{0}', space=vmem, size = 0x1000, scoped, tag = 'input window, operand 1, single buffered']
    #allocation7 [shape = 's32[1]{0}', space=sflag, size = 0x4, scoped, tag = 'scoped memory for tpu_custom_call.1']
    #allocation8 [shape = 'u8[512]{0}', space=vmem, size = 0x400, scoped, tag = 'output window, operand 0, single buffered']
    %10 = vsyncpa [#allocation4], 0
    %11 = vsyncpa [#allocation7], 0
    %12 = vsyncpa [#allocation5], 0
    // Predicated region
    $region2: #{tpu_custom_call.1} parent=1 // pred_check
      _
    $region3: #{tpu_custom_call.1} parent=1 // pred_check_branch
      %14 = sbr.rel (0) target = $region5
    $region4: #{tpu_custom_call.1} parent=1 // pred_region
      %16 = vsyncadd [#allocation4], 0
      %s18 = sshll.u32 %s0, 4
      %s19 = int_to_ptr.hbm [resolvable:$true] %s18
      %s20 = sshll.u32 [#allocation3], 4
      %s21 = int_to_ptr.vmem [resolvable:$true] %s20
      %23 = dma.hbm_to_vmem [thread:$0]  %s19, 128, %s21, [#allocation4]
    $region5: #{tpu_custom_call.1} parent=1 // pred_fallthru
      _
    // Predicated region
    $region6: #{tpu_custom_call.1} parent=1 // pred_check
      _
    $region7: #{tpu_custom_call.1} parent=1 // pred_check_branch
      %25 = sbr.rel (0) target = $region9
    $region8: #{tpu_custom_call.1} parent=1 // pred_region
      %27 = vsyncadd [#allocation7], 0
      %s29 = sshll.u32 %s1, 4
      %s30 = int_to_ptr.hbm [resolvable:$true] %s29
      %s31 = sshll.u32 [#allocation6], 4
      %s32 = int_to_ptr.vmem [resolvable:$true] %s31
      %34 = dma.hbm_to_vmem [thread:$0]  %s30, 128, %s32, [#allocation7]
    $region9: #{tpu_custom_call.1} parent=1 // pred_fallthru
      _
    // Predicated region
    $region10: #{tpu_custom_call.1} parent=1 // pred_check
      _
    $region11: #{tpu_custom_call.1} parent=1 // pred_check_branch
      %36 = sbr.rel (0) target = $region13
    $region12: #{tpu_custom_call.1} parent=1 // pred_region
      _
    $region13: #{tpu_custom_call.1} parent=1 // pred_fallthru
      _
    // Predicated region
    $region14: #{tpu_custom_call.1} parent=1 // pred_check
      _
    $region15: #{tpu_custom_call.1} parent=1 // pred_check_branch
      %38 = sbr.rel (0) target = $region17
    $region16: #{tpu_custom_call.1} parent=1 // pred_region
      _
    $region17: #{tpu_custom_call.1} parent=1 // pred_fallthru
      _
    // Predicated region
    $region18: #{tpu_custom_call.1} parent=1 // pred_check
      _
    $region19: #{tpu_custom_call.1} parent=1 // pred_check_branch
      %40 = sbr.rel (0) target = $region21
    $region20: #{tpu_custom_call.1} parent=1 // pred_region
      %42 = dma.done [#allocation4], 128
    $region21: #{tpu_custom_call.1} parent=1 // pred_fallthru
      _
    // Predicated region
    $region22: #{tpu_custom_call.1} parent=1 // pred_check
      _
    $region23: #{tpu_custom_call.1} parent=1 // pred_check_branch
      %44 = sbr.rel (0) target = $region25
    $region24: #{tpu_custom_call.1} parent=1 // pred_region
      %46 = dma.done [#allocation7], 128
    $region25: #{tpu_custom_call.1} parent=1 // pred_fallthru
      _
    %v47 = vld [vmem:[%s2] sm:$0x1]
    %v48 = vld [vmem:[%s2 + $0x1] sm:$0x1]
    %v49 = vld [vmem:[#allocation3] sm:$0xff]
    %v50 = vld [vmem:[#allocation6] sm:$0xff]
    %vm51 = vcmask 261120
    %v53 = vsel %vm51, %v48, 0
    %v56 = vsel %vm51, %v50, 0
    %58 = vmatpush.xpose.msra.mxu0 0.0
    %59 = vmatpush.xpose.msra.mxu0 0.0
    %60 = vmatpush.xpose.msra.mxu0 0.0
    %61 = vmatpush.xpose.msra.mxu0 0.0
    %62 = vmatpush.xpose.msra.mxu0 0.0
    %63 = vmatpush.xpose.msra.mxu0 0.0
    %64 = vmatpush.xpose.msra.mxu0 0.0
    %65 = vmatpush.xpose.msra.mxu0 0.0
    %66 = vmatpush.xpose.msra.mxu0 0.0
    %67 = vmatpush.xpose.msra.mxu0 0.0
    %68 = vmatpush.xpose.msra.mxu0 0.0
    %69 = vmatpush.xpose.msra.mxu0 0.0
    %70 = vmatpush.xpose.msra.mxu0 0.0
    %71 = vmatpush.xpose.msra.mxu0 0.0
    %72 = vmatpush.xpose.msra.mxu0 0.0
    %73 = vmatpush.xpose.msra.mxu0 %v56
    %74 = vmatmul.f32.gmra.mxu0 %v53
    %v75 = vpop.f32.mrf.mxu0
    %v76 = vadd.f32 0.0, %v75
    %77 = vdwg.mxu0
    %v79 = vsel %vm51, %v47, 0
    %v82 = vsel %vm51, %v49, 0
    %84 = vmatpush.xpose.msra.mxu0 0.0
    %85 = vmatpush.xpose.msra.mxu0 0.0
    %86 = vmatpush.xpose.msra.mxu0 0.0
    %87 = vmatpush.xpose.msra.mxu0 0.0
    %88 = vmatpush.xpose.msra.mxu0 0.0
    %89 = vmatpush.xpose.msra.mxu0 0.0
    %90 = vmatpush.xpose.msra.mxu0 0.0
    %91 = vmatpush.xpose.msra.mxu0 0.0
    %92 = vmatpush.xpose.msra.mxu0 0.0
    %93 = vmatpush.xpose.msra.mxu0 0.0
    %94 = vmatpush.xpose.msra.mxu0 0.0
    %95 = vmatpush.xpose.msra.mxu0 0.0
    %96 = vmatpush.xpose.msra.mxu0 0.0
    %97 = vmatpush.xpose.msra.mxu0 0.0
    %98 = vmatpush.xpose.msra.mxu0 0.0
    %99 = vmatpush.xpose.msra.mxu0 %v82
    %100 = vmatmul.f32.gmra.mxu0 %v79
    %v101 = vpop.f32.mrf.mxu0
    %v102 = vadd.f32 %v76, %v101
    %103 = vdwg.mxu0
    %s104 = sld [smem:[#allocation2]]
    %v105 = vstv %s104
    %v106 = vadd.f32 %v102, %v105
    %v107 = vxor.u32 %v106, 2147483648
    %v108 = vmul.f32 %v107, 1.442695
    %v109 = vpow.pop %v108
    %v110 = vadd.f32 %v109, 1.0
    %v111 = vrcp.pop %v110
    %v112 = vmul.f32 %v110, %v111
    %v113 = vsub.f32 1.0, %v112
    %v114 = vmul.f32 %v111, %v113
    %v115 = vadd.f32 %v111, %v114
    %vm116 = vweird.f32 %v110
    %vm117 = vweird.f32 %v111
    %vm118 = vmor %vm116, %vm117
    %v119 = vsel %vm118, %v111, %v115
    %v120 = vand.u32 2147483647, %v110
    %vm121 = vcmp.eq.f32.partialorder %v120, 8.507059e+37
    %v122 = vand.u32 %v110, 2147483648
    %v123 = vor.u32 1.1754944e-38, %v122
    %v124 = vsel %vm121, %v123, %v119
    %v125 = vmul.f32 1.0, %v124
    %vm126 = vcmask 57344
    %127 = vst.msk [vmem:[#allocation8] sm:$0x1] %vm126, %v125
    // Predicated region
    $region26: #{tpu_custom_call.1} parent=1 // pred_check
      _
    $region27: #{tpu_custom_call.1} parent=1 // pred_check_branch
      %129 = sbr.rel (0) target = $region29
    $region28: #{tpu_custom_call.1} parent=1 // pred_region
      %131 = vsyncadd [#allocation5], 0
      %s133 = sshll.u32 [#allocation8], 4
      %s134 = int_to_ptr.vmem [resolvable:$true] %s133
      %s135 = sshll.u32 %s4, 4
      %s136 = int_to_ptr.hbm [resolvable:$true] %s135
      %138 = dma.vmem_to_hbm [thread:$0]  %s134, 16, %s136, [#allocation5]
    $region29: #{tpu_custom_call.1} parent=1 // pred_fallthru
      _
    // Predicated region
    $region30: #{tpu_custom_call.1} parent=1 // pred_check
      _
    $region31: #{tpu_custom_call.1} parent=1 // pred_check_branch
      %140 = sbr.rel (0) target = $region33
    $region32: #{tpu_custom_call.1} parent=1 // pred_region
      %142 = dma.done [#allocation5], 16
    $region33: #{tpu_custom_call.1} parent=1 // pred_fallthru
      _
    %143 = vsyncpa [#allocation4], 1
    %144 = vsyncpa [#allocation7], 1
    %145 = vsyncpa [#allocation5], 1

</llo_original>
